<compile_context>
chip_gen: v6e
topology: v6e:2x2x1
jax: 0.10.0
libtpu: 0.0.40
codegen_flags: <defaults>
</compile_context>

<pallas_src>
import functools

import jax
import jax.numpy as jnp
from jax.experimental import pallas as pl
from jax.experimental.pallas import tpu as pltpu

WIDTH = 1024        # lane axis (last dim), large multiple of 128 -> unmasked stores
BLOCK_ROWS = 1024   # 1024 * 1024 * 4 B = 4 MiB f32 per block


def _poly_kernel(degree, w_ref, x_ref, o_ref):
    """Horner evaluation of y = sum_i W[i] * x**i on one (block_rows, WIDTH) tile.

    w_ref : SMEM ref, shape (degree,), float32 (read as scalars)
    x_ref : VMEM ref, shape (block_rows, WIDTH), float32
    o_ref : VMEM ref, shape (block_rows, WIDTH), float32
    """
    # Hoist all scalar reads before the vector load.
    w = [w_ref[i] for i in range(degree)]
    x = x_ref[...]
    if degree == 1:                       # wrapper short-circuits; kept for safety
        o_ref[...] = jnp.full(x.shape, w[0], dtype=x.dtype)
        return
    # Fold the first Horner step: acc = x * w[d-1] + w[d-2]; then acc = acc*x + w[i].
    acc = x * w[degree - 1] + w[degree - 2]
    for i in range(degree - 3, -1, -1):
        acc = acc * x + w[i]
    o_ref[...] = acc


def _choose_block_rows(rows):
    """Pick block_rows (multiple of 8, <= BLOCK_ROWS) so the grid has >=4 programs
    when possible (keeps both v7x TensorCores busy and leaves pipelining headroom)."""
    if rows <= 8:
        return rows                       # full-dim block (allowed even if < 8)
    desired = ((pl.cdiv(rows, 4) + 7) // 8) * 8
    return max(8, min(BLOCK_ROWS, desired))


def polynomial_regression_forward(x, w):
    """x: (N,) float32, w: (degree, 1) float32 -> (N,) float32."""
    degree = int(w.shape[0])
    n = int(x.shape[0])
    x = x.astype(jnp.float32)
    w_flat = w.reshape(-1).astype(jnp.float32)

    if degree == 0:
        # matches (N, 0) @ (0, 1) -> zeros
        return jnp.zeros((n,), dtype=jnp.float32)
    if degree == 1:
        # y = w[0] * x**0 : constant, no need to stream x through HBM at all.
        return jnp.full((n,), w_flat[0], dtype=jnp.float32)

    m = (n // WIDTH) * WIDTH              # aligned prefix (free reshape, no pad)
    t = n - m                             # ragged tail, < WIDTH elements

    outs = []
    if m > 0:
        rows = m // WIDTH
        block_rows = _choose_block_rows(rows)
        grid = (pl.cdiv(rows, block_rows),)   # partial edge block handled by Pallas
        x2 = x[:m].reshape(rows, WIDTH)

        out2 = pl.pallas_call(
            functools.partial(_poly_kernel, degree),
            out_shape=jax.ShapeDtypeStruct((rows, WIDTH), jnp.float32),
            grid_spec=pl.GridSpec(
                grid=grid,
                in_specs=[
                    pl.BlockSpec(memory_space=pltpu.MemorySpace.SMEM),    # W scalars
                    pl.BlockSpec((block_rows, WIDTH), lambda i: (i, 0)),  # x tile
                ],
                out_specs=pl.BlockSpec((block_rows, WIDTH), lambda i: (i, 0)),
            ),
            compiler_params=pltpu.CompilerParams(
                dimension_semantics=("parallel",),
                vmem_limit_bytes=32 * 1024 * 1024,
            ),
            cost_estimate=pl.CostEstimate(
                flops=2 * (degree - 1) * m,
                transcendentals=0,
                bytes_accessed=8 * m,       # 4 B in + 4 B out per element
            ),
        )(w_flat, x2)
        outs.append(out2.reshape(-1))       # free bitcast back to 1-D, exact size

    if t > 0:
        # Tiny tail (< 1024 elems): evaluate with plain jnp Horner, negligible cost.
        xt = x[m:]
        acc = xt * w_flat[degree - 1] + w_flat[degree - 2]
        for i in range(degree - 3, -1, -1):
            acc = acc * xt + w_flat[i]
        outs.append(acc)

    if len(outs) == 1:
        return outs[0]
    return jnp.concatenate(outs)


def _reference(x, w):
    degree = w.shape[0]
    X = jnp.stack([x ** i for i in range(degree)], axis=1)   # (N, degree)
    return jnp.squeeze(X @ w)                                # (N,)


if __name__ == "__main__":
    degree = 3
    # Deterministic parameter init, matching torch.nn.Parameter(torch.ones(degree, 1)).
    W = jnp.ones((degree, 1), dtype=jnp.float32)
    key = jax.random.PRNGKey(0)
    k1, k2, k3 = jax.random.split(key, 3)

    # Test 1: WIDTH-aligned N (single-block kernel path, exact-size output, no tail).
    n1 = 8 * WIDTH
    x1 = jax.random.normal(k1, (n1,), dtype=jnp.float32)
    y1 = jax.block_until_ready(polynomial_regression_forward(x1, W))
    assert y1.shape == (n1,)
    assert jnp.allclose(y1, _reference(x1, W), rtol=1e-5, atol=1e-5), "mismatch (aligned)"

    # Test 2: ragged N with multi-block grid (rows=24 -> grid=3) plus tail path + concat.
    n2 = 24 * WIDTH + 517
    x2 = jax.random.normal(k2, (n2,), dtype=jnp.float32)
    y2 = jax.block_until_ready(polynomial_regression_forward(x2, W))
    assert y2.shape == (n2,)
    assert jnp.allclose(y2, _reference(x2, W), rtol=1e-5, atol=1e-5), "mismatch (ragged)"

    # Test 3: tiny N < WIDTH (pure tail path, no pallas_call).
    n3 = 100
    x3 = jax.random.normal(k3, (n3,), dtype=jnp.float32)
    y3 = jax.block_until_ready(polynomial_regression_forward(x3, W))
    assert y3.shape == (n3,)
    assert jnp.allclose(y3, _reference(x3, W), rtol=1e-5, atol=1e-5), "mismatch (tail-only)"

    # Test 4: degree == 1 short-circuit (constant output = W[0]).
    W1 = jnp.ones((1, 1), dtype=jnp.float32)
    y4 = jax.block_until_ready(polynomial_regression_forward(x3, W1))
    assert jnp.allclose(y4, _reference(x3, W1), rtol=1e-5, atol=1e-5), "mismatch (degree=1)"

    print("KERNEL_OK")
</pallas_src>

<mosaic_0001>
module attributes {stable_mosaic.version = 11 : i64} {
  func.func @_poly_kernel(%arg0: i32, %arg1: memref<3xf32, #tpu.memory_space<smem>>, %arg2: memref<8x1024xf32, #tpu.memory_space<vmem>>, %arg3: memref<8x1024xf32, #tpu.memory_space<vmem>>) attributes {dimension_semantics = [#tpu.dimension_semantics<parallel>], iteration_bounds = array<i64: 1>, scalar_prefetch = 0 : i64, scratch_operands = 0 : i64, tpu.core_type = #tpu.core_type<tc>, window_params = [{transform_indices = @transform_0, window_bounds = array<i64: 3>}, {transform_indices = @transform_1, window_bounds = array<i64: 8, 1024>}, {transform_indices = @transform_2, window_bounds = array<i64: 8, 1024>}]} {
    %c0 = arith.constant 0 : index
    %0 = memref.load %arg1[%c0] : memref<3xf32, #tpu.memory_space<smem>>
    %c1 = arith.constant 1 : index
    %1 = memref.load %arg1[%c1] : memref<3xf32, #tpu.memory_space<smem>>
    %c2 = arith.constant 2 : index
    %2 = memref.load %arg1[%c2] : memref<3xf32, #tpu.memory_space<smem>>
    %c0_0 = arith.constant 0 : index
    %c0_1 = arith.constant 0 : index
    %3 = vector.load %arg2[%c0_0, %c0_1] : memref<8x1024xf32, #tpu.memory_space<vmem>>, vector<8x1024xf32>
    %4 = vector.broadcast %2 : f32 to vector<8x1024xf32>
    %5 = arith.mulf %3, %4 : vector<8x1024xf32>
    %6 = vector.broadcast %1 : f32 to vector<8x1024xf32>
    %7 = arith.addf %5, %6 : vector<8x1024xf32>
    %8 = arith.mulf %7, %3 : vector<8x1024xf32>
    %9 = vector.broadcast %0 : f32 to vector<8x1024xf32>
    %10 = arith.addf %8, %9 : vector<8x1024xf32>
    %c0_2 = arith.constant 0 : index
    %c0_3 = arith.constant 0 : index
    %11 = vector.load %arg3[%c0_2, %c0_3] : memref<8x1024xf32, #tpu.memory_space<vmem>>, vector<8x1024xf32>
    tpu.vector_store %arg3[%c0_2, %c0_3], %10 {strides = array<i32>} : memref<8x1024xf32, #tpu.memory_space<vmem>>, vector<8x1024xf32>,
    return
  }
  func.func @transform_0(%arg0: i32) -> i32 {
    %c0_i32 = arith.constant 0 : i32
    %c0_i32_0 = arith.constant 0 : i32
    return %c0_i32 : i32
  }
  func.func @transform_1(%arg0: i32) -> (i32, i32) {
    %c0_i32 = arith.constant 0 : i32
    %c0_i32_0 = arith.constant 0 : i32
    return %arg0, %c0_i32 : i32, i32
  }
  func.func @transform_2(%arg0: i32) -> (i32, i32) {
    %c0_i32 = arith.constant 0 : i32
    %c0_i32_0 = arith.constant 0 : i32
    return %arg0, %c0_i32 : i32, i32
  }
}

</mosaic_0001>

<llo_original>
// kernel: tpu_custom_call.1
$region0: #{tpu_custom_call.1}
  #allocation0 [shape = 'u32[]', space=smem, size = 0x4, offset = 0x4, fixed_abs, tag = 'smem constant byte address 0x4 - core index']
  #allocation1 [shape = 'u32[144,128]{1,0:T(1,128)}', space=vmem, size = 0x12000, scoped, tag = 'internal scratch']
  %s0 = inlined_call_operand.hbm [shape: f32[3], index: 0, kind: input, shape index: {}]
  %s1 = inlined_call_operand.hbm [shape: f32[8,1024], index: 1, kind: input, shape index: {}]
  %s2 = inlined_call_operand.hbm [shape: f32[8,1024], index: 2, kind: output, shape index: {}]
  %s3 = sld [smem:[#allocation0]]
  $region26: #{tpu_custom_call.1} parent=0
    _
  %s5 = ssub.s32 1, %s3
  %s6 = scalar_select 0, %s5, %s3
  $region1: #{tpu_custom_call.1} parent=0
    #allocation2 [shape = 'u8[512]{0}', space=smem, size = 0x200, scoped, tag = 'input window, operand 0, single buffered']
    #allocation3 [shape = 's32[1]{0}', space=sflag, size = 0x4, scoped, tag = 'scoped memory for tpu_custom_call.1']
    #allocation4 [shape = 's32[1]{0}', space=sflag, size = 0x4, scoped, tag = 'scoped memory for tpu_custom_call.1']
    #allocation5 [shape = 's32[1]{0}', space=sflag, size = 0x4, scoped, tag = 'scoped memory for tpu_custom_call.1']
    #allocation6 [shape = 'u8[32768]{0}', space=vmem, size = 0x8000, scoped, tag = 'input window, operand 1, single buffered']
    #allocation7 [shape = 'u8[32768]{0}', space=vmem, size = 0x8000, scoped, tag = 'output window, operand 0, single buffered']
    %7 = vsyncpa [#allocation5], 0
    %8 = vsyncpa [#allocation3], 0
    %9 = vsyncpa [#allocation4], 0
    // Predicated region
    $region2: #{tpu_custom_call.1} parent=1 // pred_check
      _
    $region3: #{tpu_custom_call.1} parent=1 // pred_check_branch
      %11 = sbr.rel (0) target = $region5
    $region4: #{tpu_custom_call.1} parent=1 // pred_region
      %s13 = ssub.s32 16, 16
      %14 = vsyncadd [#allocation5], %s13
      %17 = dma.hbm_to_smem %s0, 16, [#allocation2], [#allocation5]
    $region5: #{tpu_custom_call.1} parent=1 // pred_fallthru
      _
    // Predicated region
    $region6: #{tpu_custom_call.1} parent=1 // pred_check
      _
    $region7: #{tpu_custom_call.1} parent=1 // pred_check_branch
      %19 = sbr.rel (0) target = $region9
    $region8: #{tpu_custom_call.1} parent=1 // pred_region
      %s21 = ssub.s32 1024, 1024
      %22 = vsyncadd [#allocation3], %s21
      %s24 = sshll.u32 [#allocation6], 4
      %s25 = int_to_ptr.vmem [resolvable:$true] %s24
      %27 = dma.hbm_to_vmem [thread:$0]  %s1, 1024, %s25, [#allocation3]
    $region9: #{tpu_custom_call.1} parent=1 // pred_fallthru
      _
    // Predicated region
    $region10: #{tpu_custom_call.1} parent=1 // pred_check
      _
    $region11: #{tpu_custom_call.1} parent=1 // pred_check_branch
      %29 = sbr.rel (0) target = $region13
    $region12: #{tpu_custom_call.1} parent=1 // pred_region
      %30 = dma.done [#allocation5], 16
    $region13: #{tpu_custom_call.1} parent=1 // pred_fallthru
      _
    // Predicated region
    $region14: #{tpu_custom_call.1} parent=1 // pred_check
      _
    $region15: #{tpu_custom_call.1} parent=1 // pred_check_branch
      %32 = sbr.rel (0) target = $region17
    $region16: #{tpu_custom_call.1} parent=1 // pred_region
      %33 = dma.done [#allocation3], 1024
    $region17: #{tpu_custom_call.1} parent=1 // pred_fallthru
      _
    %34 = sfence
    %s35 = sld [smem:[#allocation2]]
    %s36 = sld [smem:[#allocation2 + $0x1]]
    %s37 = sld [smem:[#allocation2 + $0x2]]
    %v38 = vld [vmem:[#allocation6] sm:$0xff]
    %v39 = vld [vmem:[#allocation6 + $0x8] sm:$0xff]
    %v40 = vld [vmem:[#allocation6 + $0x10] sm:$0xff]
    %v41 = vld [vmem:[#allocation6 + $0x18] sm:$0xff]
    %v42 = vld [vmem:[#allocation6 + $0x20] sm:$0xff]
    %v43 = vld [vmem:[#allocation6 + $0x28] sm:$0xff]
    %v44 = vld [vmem:[#allocation6 + $0x30] sm:$0xff]
    %v45 = vld [vmem:[#allocation6 + $0x38] sm:$0xff]
    %v46 = vstv %s37
    %v47 = vmul.f32 %v38, %v46
    %v48 = vmul.f32 %v39, %v46
    %v49 = vmul.f32 %v40, %v46
    %v50 = vmul.f32 %v41, %v46
    %v51 = vmul.f32 %v42, %v46
    %v52 = vmul.f32 %v43, %v46
    %v53 = vmul.f32 %v44, %v46
    %v54 = vmul.f32 %v45, %v46
    %v55 = vstv %s36
    %v56 = vadd.f32 %v47, %v55
    %v57 = vadd.f32 %v48, %v55
    %v58 = vadd.f32 %v49, %v55
    %v59 = vadd.f32 %v50, %v55
    %v60 = vadd.f32 %v51, %v55
    %v61 = vadd.f32 %v52, %v55
    %v62 = vadd.f32 %v53, %v55
    %v63 = vadd.f32 %v54, %v55
    %v64 = vmul.f32 %v56, %v38
    %v65 = vmul.f32 %v57, %v39
    %v66 = vmul.f32 %v58, %v40
    %v67 = vmul.f32 %v59, %v41
    %v68 = vmul.f32 %v60, %v42
    %v69 = vmul.f32 %v61, %v43
    %v70 = vmul.f32 %v62, %v44
    %v71 = vmul.f32 %v63, %v45
    %v72 = vstv %s35
    %v73 = vadd.f32 %v64, %v72
    %v74 = vadd.f32 %v65, %v72
    %v75 = vadd.f32 %v66, %v72
    %v76 = vadd.f32 %v67, %v72
    %v77 = vadd.f32 %v68, %v72
    %v78 = vadd.f32 %v69, %v72
    %v79 = vadd.f32 %v70, %v72
    %v80 = vadd.f32 %v71, %v72
    %81 = vst [vmem:[#allocation7] sm:$0xff] %v73
    %82 = vst [vmem:[#allocation7 + $0x8] sm:$0xff] %v74
    %83 = vst [vmem:[#allocation7 + $0x10] sm:$0xff] %v75
    %84 = vst [vmem:[#allocation7 + $0x18] sm:$0xff] %v76
    %85 = vst [vmem:[#allocation7 + $0x20] sm:$0xff] %v77
    %86 = vst [vmem:[#allocation7 + $0x28] sm:$0xff] %v78
    %87 = vst [vmem:[#allocation7 + $0x30] sm:$0xff] %v79
    %88 = vst [vmem:[#allocation7 + $0x38] sm:$0xff] %v80
    // Predicated region
    $region18: #{tpu_custom_call.1} parent=1 // pred_check
      _
    $region19: #{tpu_custom_call.1} parent=1 // pred_check_branch
      %90 = sbr.rel (0) target = $region21
    $region20: #{tpu_custom_call.1} parent=1 // pred_region
      %s92 = ssub.s32 1024, 1024
      %93 = vsyncadd [#allocation4], %s92
      %s95 = sshll.u32 [#allocation7], 4
      %s96 = int_to_ptr.vmem [resolvable:$true] %s95
      %98 = dma.vmem_to_hbm [thread:$0]  %s96, 1024, %s2, [#allocation4]
    $region21: #{tpu_custom_call.1} parent=1 // pred_fallthru
      _
    // Predicated region
    $region22: #{tpu_custom_call.1} parent=1 // pred_check
      _
    $region23: #{tpu_custom_call.1} parent=1 // pred_check_branch
      %100 = sbr.rel (0) target = $region25
    $region24: #{tpu_custom_call.1} parent=1 // pred_region
      %101 = dma.done [#allocation4], 1024
    $region25: #{tpu_custom_call.1} parent=1 // pred_fallthru
      _
    %102 = vsyncpa [#allocation3], 1
    %103 = vsyncpa [#allocation4], 1
    %104 = vsyncpa [#allocation5], 1

</llo_original>
